<compile_context>
chip_gen: v6e
topology: v6e:2x2x1
jax: 0.10.0
libtpu: 0.0.40
codegen_flags: <defaults>
</compile_context>

<pallas_src>
import jax
import jax.numpy as jnp
from jax.experimental import pallas as pl
from jax.experimental.pallas import tpu as pltpu

_RW, _GW, _BW = 0.299, 0.587, 0.114


def _rgb_to_gray_kernel_dense(x_ref, o_ref):
    # x_ref: (tb, 3, tR, 128) block in VMEM; o_ref: (tb, 1, tR, 128) block.
    r = x_ref[:, 0:1, :, :].astype(jnp.float32)
    g = x_ref[:, 1:2, :, :].astype(jnp.float32)
    b = x_ref[:, 2:3, :, :].astype(jnp.float32)
    o_ref[...] = (_RW * r + _GW * g + _BW * b).astype(o_ref.dtype)


def _rgb_to_gray_kernel_flat(x_ref, o_ref):
    # Fallback layout. x_ref: (tb, 3, tN); o_ref: (tb, 1, tN).
    r = x_ref[:, 0:1, :].astype(jnp.float32)
    g = x_ref[:, 1:2, :].astype(jnp.float32)
    b = x_ref[:, 2:3, :].astype(jnp.float32)
    o_ref[...] = (_RW * r + _GW * g + _BW * b).astype(o_ref.dtype)


def _step_budget():
    """(bytes moved per grid step, vmem_limit_bytes) tuned per TPU generation."""
    try:
        kind = jax.devices()[0].device_kind.lower()
    except Exception:
        kind = ""
    if "v7" in kind:
        # Big steps amortize the ~0.35us/step overhead against 3.2 TB/s HBM;
        # 32 MiB double-buffered working set fits under an explicit 48 MiB limit.
        return 16 << 20, 48 << 20
    if "v6" in kind:
        return 8 << 20, 32 << 20     # 16 MiB double-buffered, within scoped default
    return 4 << 20, None             # v5e / unknown: 8 MiB db < 16 MiB scoped default


def _grid_and_map_4d(n_row_tiles, n_batch_tiles):
    # Larger axis first -> megacore (v7x) shards the axis that has work.
    if n_row_tiles >= n_batch_tiles:
        return (n_row_tiles, n_batch_tiles), (lambda t, b: (b, 0, t, 0))
    return (n_batch_tiles, n_row_tiles), (lambda b, t: (b, 0, t, 0))


def _grid_and_map_3d(n_px_tiles, n_batch_tiles):
    if n_px_tiles >= n_batch_tiles:
        return (n_px_tiles, n_batch_tiles), (lambda t, b: (b, 0, t))
    return (n_batch_tiles, n_px_tiles), (lambda b, t: (b, 0, t))


def rgb_to_grayscale(image: jax.Array) -> jax.Array:
    """Convert RGB image(s) of shape (*, 3, H, W) to grayscale (*, 1, H, W)."""
    if image.ndim < 3 or image.shape[-3] != 3:
        raise ValueError(
            "Input size must have a shape of (*, 3, H, W). Got {}".format(image.shape)
        )

    lead_shape = image.shape[:-3]
    H, W = image.shape[-2], image.shape[-1]
    N = H * W
    B = 1
    for d in lead_shape:
        B *= d

    # Float input keeps its dtype; integer input promotes to f32 (matches torch's
    # int * python-float promotion and avoids truncating casts).
    out_dtype = image.dtype if jnp.issubdtype(image.dtype, jnp.floating) else jnp.float32

    step_bytes, vmem_limit = _step_budget()
    per_px_bytes = 3 * jnp.dtype(image.dtype).itemsize + jnp.dtype(out_dtype).itemsize
    px_budget = max(128, step_bytes // per_px_bytes)   # pixels moved per grid step

    compiler_params = pltpu.CompilerParams(
        dimension_semantics=("parallel", "parallel"),
        vmem_limit_bytes=vmem_limit,
    )

    if N % 128 == 0:
        # ---- Dense path: last two block dims are (rows, 128) -> fully packed vregs.
        R = N // 128
        x = image.reshape((B, 3, R, 128))     # contiguous reshape, no HBM copy

        if N >= px_budget:
            tb = 1
            rows = max(32, (px_budget // 128) // 32 * 32)   # multiple of 32 sublanes
            t_r = min(R, rows)                              # t_r==R is also legal
        else:
            t_r = R                                         # whole image per step
            tb = min(B, max(1, px_budget // N))             # batch small images

        n_row_tiles = pl.cdiv(R, t_r)
        n_batch_tiles = pl.cdiv(B, tb)
        grid, index_map = _grid_and_map_4d(n_row_tiles, n_batch_tiles)

        out = pl.pallas_call(
            _rgb_to_gray_kernel_dense,
            out_shape=jax.ShapeDtypeStruct((B, 1, R, 128), out_dtype),
            grid_spec=pltpu.PrefetchScalarGridSpec(
                num_scalar_prefetch=0,
                grid=grid,
                in_specs=[pl.BlockSpec((tb, 3, t_r, 128), index_map)],
                out_specs=pl.BlockSpec((tb, 1, t_r, 128), index_map),
            ),
            compiler_params=compiler_params,
        )(x)
    else:
        # ---- Fallback path (N % 128 != 0): flattened pixel axis, ragged tiles
        # masked by Pallas. Correct for any H, W.
        x = image.reshape((B, 3, N))

        if N >= px_budget:
            tb = 1
            t_n = max(128, (px_budget // 128) * 128)
        else:
            t_n = N                                         # full extent: always legal
            tb = min(B, max(1, px_budget // N))

        n_px_tiles = pl.cdiv(N, t_n)
        n_batch_tiles = pl.cdiv(B, tb)
        grid, index_map = _grid_and_map_3d(n_px_tiles, n_batch_tiles)

        out = pl.pallas_call(
            _rgb_to_gray_kernel_flat,
            out_shape=jax.ShapeDtypeStruct((B, 1, N), out_dtype),
            grid_spec=pltpu.PrefetchScalarGridSpec(
                num_scalar_prefetch=0,
                grid=grid,
                in_specs=[pl.BlockSpec((tb, 3, t_n), index_map)],
                out_specs=pl.BlockSpec((tb, 1, t_n), index_map),
            ),
            compiler_params=compiler_params,
        )(x)

    return out.reshape(lead_shape + (1, H, W))


if __name__ == "__main__":
    key = jax.random.PRNGKey(0)
    x = jax.random.uniform(key, (2, 3, 16, 16), dtype=jnp.float32)

    gray = rgb_to_grayscale(x)
    jax.block_until_ready(gray)

    ref = 0.299 * x[:, 0:1] + 0.587 * x[:, 1:2] + 0.114 * x[:, 2:3]
    assert gray.shape == (2, 1, 16, 16), gray.shape
    assert jnp.allclose(gray, ref, atol=1e-6), "mismatch vs reference (dense path)"

    # Exercise the fallback path (H*W not a multiple of 128), kornia docstring shape.
    x2 = jax.random.uniform(jax.random.PRNGKey(1), (2, 3, 4, 5), dtype=jnp.float32)
    gray2 = rgb_to_grayscale(x2)
    jax.block_until_ready(gray2)
    ref2 = 0.299 * x2[:, 0:1] + 0.587 * x2[:, 1:2] + 0.114 * x2[:, 2:3]
    assert gray2.shape == (2, 1, 4, 5), gray2.shape
    assert jnp.allclose(gray2, ref2, atol=1e-6), "mismatch vs reference (fallback path)"

    print("KERNEL_OK")
</pallas_src>

<mosaic_0001>
module attributes {stable_mosaic.version = 11 : i64} {
  func.func @_rgb_to_gray_kernel_dense(%arg0: i32, %arg1: i32, %arg2: memref<2x3x2x128xf32, #tpu.memory_space<vmem>>, %arg3: memref<2x1x2x128xf32, #tpu.memory_space<vmem>>) attributes {dimension_semantics = [#tpu.dimension_semantics<parallel>, #tpu.dimension_semantics<parallel>], iteration_bounds = array<i64: 1, 1>, scalar_prefetch = 0 : i64, scratch_operands = 0 : i64, tpu.core_type = #tpu.core_type<tc>, window_params = [{transform_indices = @transform_0, window_bounds = array<i64: 2, 3, 2, 128>}, {transform_indices = @transform_1, window_bounds = array<i64: 2, 1, 2, 128>}]} {
    %c0 = arith.constant 0 : index
    %c0_0 = arith.constant 0 : index
    %c0_1 = arith.constant 0 : index
    %c0_2 = arith.constant 0 : index
    %0 = vector.load %arg2[%c0, %c0_0, %c0_1, %c0_2] : memref<2x3x2x128xf32, #tpu.memory_space<vmem>>, vector<2x1x2x128xf32>
    %c0_3 = arith.constant 0 : index
    %c1 = arith.constant 1 : index
    %c0_4 = arith.constant 0 : index
    %c0_5 = arith.constant 0 : index
    %1 = vector.load %arg2[%c0_3, %c1, %c0_4, %c0_5] : memref<2x3x2x128xf32, #tpu.memory_space<vmem>>, vector<2x1x2x128xf32>
    %c0_6 = arith.constant 0 : index
    %c2 = arith.constant 2 : index
    %c0_7 = arith.constant 0 : index
    %c0_8 = arith.constant 0 : index
    %2 = vector.load %arg2[%c0_6, %c2, %c0_7, %c0_8] : memref<2x3x2x128xf32, #tpu.memory_space<vmem>>, vector<2x1x2x128xf32>
    %cst = arith.constant 2.990000e-01 : f32
    %3 = vector.broadcast %cst : f32 to vector<2x1x2x128xf32>
    %4 = arith.mulf %3, %0 : vector<2x1x2x128xf32>
    %cst_9 = arith.constant 5.870000e-01 : f32
    %5 = vector.broadcast %cst_9 : f32 to vector<2x1x2x128xf32>
    %6 = arith.mulf %5, %1 : vector<2x1x2x128xf32>
    %7 = arith.addf %4, %6 : vector<2x1x2x128xf32>
    %cst_10 = arith.constant 1.140000e-01 : f32
    %8 = vector.broadcast %cst_10 : f32 to vector<2x1x2x128xf32>
    %9 = arith.mulf %8, %2 : vector<2x1x2x128xf32>
    %10 = arith.addf %7, %9 : vector<2x1x2x128xf32>
    %c0_11 = arith.constant 0 : index
    %c0_12 = arith.constant 0 : index
    %c0_13 = arith.constant 0 : index
    %c0_14 = arith.constant 0 : index
    %11 = vector.load %arg3[%c0_11, %c0_12, %c0_13, %c0_14] : memref<2x1x2x128xf32, #tpu.memory_space<vmem>>, vector<2x1x2x128xf32>
    tpu.vector_store %arg3[%c0_11, %c0_12, %c0_13, %c0_14], %10 {strides = array<i32>} : memref<2x1x2x128xf32, #tpu.memory_space<vmem>>, vector<2x1x2x128xf32>,
    return
  }
  func.func @transform_0(%arg0: i32, %arg1: i32) -> (i32, i32, i32, i32) {
    %c0_i32 = arith.constant 0 : i32
    %c0_i32_0 = arith.constant 0 : i32
    %c0_i32_1 = arith.constant 0 : i32
    return %arg1, %c0_i32, %arg0, %c0_i32_0 : i32, i32, i32, i32
  }
  func.func @transform_1(%arg0: i32, %arg1: i32) -> (i32, i32, i32, i32) {
    %c0_i32 = arith.constant 0 : i32
    %c0_i32_0 = arith.constant 0 : i32
    %c0_i32_1 = arith.constant 0 : i32
    return %arg1, %c0_i32, %arg0, %c0_i32_0 : i32, i32, i32, i32
  }
}

</mosaic_0001>

<llo_original>
// kernel: tpu_custom_call.1
$region0: #{tpu_custom_call.1}
  #allocation0 [shape = 'u32[]', space=smem, size = 0x4, offset = 0x4, fixed_abs, tag = 'smem constant byte address 0x4 - core index']
  #allocation1 [shape = 'u32[144,128]{1,0:T(1,128)}', space=vmem, size = 0x12000, scoped, tag = 'internal scratch']
  %s0 = inlined_call_operand.hbm [shape: f32[2,3,2,128], index: 0, kind: input, shape index: {}]
  %s1 = inlined_call_operand.hbm [shape: f32[2,1,2,128], index: 1, kind: output, shape index: {}]
  %s2 = sld [smem:[#allocation0]]
  $region18: #{tpu_custom_call.1} parent=0
    _
  %s4 = ssub.s32 1, %s2
  %s5 = scalar_select 0, %s4, %s2
  $region1: #{tpu_custom_call.1} parent=0
    #allocation2 [shape = 'u8[6144]{0}', space=vmem, size = 0x1800, scoped, tag = 'input window, operand 0, single buffered']
    #allocation3 [shape = 's32[1]{0}', space=sflag, size = 0x4, scoped, tag = 'scoped memory for tpu_custom_call.1']
    #allocation4 [shape = 's32[1]{0}', space=sflag, size = 0x4, scoped, tag = 'scoped memory for tpu_custom_call.1']
    #allocation5 [shape = 'u8[2048]{0}', space=vmem, size = 0x800, scoped, tag = 'output window, operand 0, single buffered']
    %6 = vsyncpa [#allocation3], 0
    %7 = vsyncpa [#allocation4], 0
    // Predicated region
    $region2: #{tpu_custom_call.1} parent=1 // pred_check
      _
    $region3: #{tpu_custom_call.1} parent=1 // pred_check_branch
      %9 = sbr.rel (0) target = $region5
    $region4: #{tpu_custom_call.1} parent=1 // pred_region
      %s11 = ssub.s32 192, 192
      %12 = vsyncadd [#allocation3], %s11
      %s13 = sshll.u32 [#allocation2], 4
      %s14 = int_to_ptr.vmem [resolvable:$true] %s13
      %19 = dma.hbm_to_vmem [thread:$0]  %s0, 192, %s14, [#allocation3], 32, 32, 2
    $region5: #{tpu_custom_call.1} parent=1 // pred_fallthru
      _
    // Predicated region
    $region6: #{tpu_custom_call.1} parent=1 // pred_check
      _
    $region7: #{tpu_custom_call.1} parent=1 // pred_check_branch
      %21 = sbr.rel (0) target = $region9
    $region8: #{tpu_custom_call.1} parent=1 // pred_region
      %22 = dma.done [#allocation3], 192
    $region9: #{tpu_custom_call.1} parent=1 // pred_fallthru
      _
    %v23 = vld [vmem:[#allocation2] sm:$0x3]
    %v24 = vld [vmem:[#allocation2 + $0x6] sm:$0x3]
    %s25 = scalar_lea.vmem [#allocation2], 2
    %v26 = vld [vmem:[%s25] sm:$0x3]
    %v27 = vld [vmem:[%s25 + $0x6] sm:$0x3]
    %s28 = scalar_lea.vmem [#allocation2], 4
    %v29 = vld [vmem:[%s28] sm:$0x3]
    %v30 = vld [vmem:[%s28 + $0x6] sm:$0x3]
    %v31 = vmul.f32 %v23, 0.299
    %v32 = vmul.f32 %v24, 0.299
    %v33 = vmul.f32 %v26, 0.587
    %v34 = vmul.f32 %v27, 0.587
    %v35 = vadd.f32 %v31, %v33
    %v36 = vadd.f32 %v32, %v34
    %v37 = vmul.f32 %v29, 0.114
    %v38 = vmul.f32 %v30, 0.114
    %v39 = vadd.f32 %v35, %v37
    %v40 = vadd.f32 %v36, %v38
    %41 = vst [vmem:[#allocation5] sm:$0x3] %v39
    %42 = vst [vmem:[#allocation5 + $0x2] sm:$0x3] %v40
    // Predicated region
    $region10: #{tpu_custom_call.1} parent=1 // pred_check
      _
    $region11: #{tpu_custom_call.1} parent=1 // pred_check_branch
      %44 = sbr.rel (0) target = $region13
    $region12: #{tpu_custom_call.1} parent=1 // pred_region
      %s46 = ssub.s32 64, 64
      %47 = vsyncadd [#allocation4], %s46
      %s48 = sshll.u32 [#allocation5], 4
      %s49 = int_to_ptr.vmem [resolvable:$true] %s48
      %54 = dma.vmem_to_hbm [thread:$0]  %s49, 64, %s1, [#allocation4], 32, 32, 2
    $region13: #{tpu_custom_call.1} parent=1 // pred_fallthru
      _
    // Predicated region
    $region14: #{tpu_custom_call.1} parent=1 // pred_check
      _
    $region15: #{tpu_custom_call.1} parent=1 // pred_check_branch
      %56 = sbr.rel (0) target = $region17
    $region16: #{tpu_custom_call.1} parent=1 // pred_region
      %57 = dma.done [#allocation4], 64
    $region17: #{tpu_custom_call.1} parent=1 // pred_fallthru
      _
    %58 = vsyncpa [#allocation3], 1
    %59 = vsyncpa [#allocation4], 1

</llo_original>
